<compile_context>
chip_gen: v6e
topology: v6e:2x2x1
jax: 0.10.0
libtpu: 0.0.40
codegen_flags: <defaults>
</compile_context>

<pallas_src>
import jax
import jax.numpy as jnp
from jax.experimental import pallas as pl
from jax.experimental.pallas import tpu as pltpu


_SUBLANES = {4: 8, 2: 16, 1: 32}   # second-to-last-dim padding per itemsize


def _round_up(v, m):
    return -(-v // m) * m


def _padded_in_bytes(nt, ct, thw, itemsize, sub):
    # (nt, ct, thw) input block: trailing dims live in (sublane, 128-lane) tiles.
    return nt * _round_up(ct, sub) * _round_up(thw, 128) * itemsize


def _padded_out_bytes(nt, ct, itemsize, sub):
    # (nt, 2, ct) fused output block.
    return nt * _round_up(2, sub) * _round_up(ct, 128) * itemsize


def _choose_tiles(N, C, HW, itemsize, budget_bytes):
    """Pick (Nt, Ct, THW) so the *padded* per-block footprint (input block +
    output block) stays within budget_bytes (Pallas double-buffers both)."""
    sub = _SUBLANES.get(itemsize, 8)

    def block_bytes(nt, ct, thw):
        return (_padded_in_bytes(nt, ct, thw, itemsize, sub)
                + _padded_out_bytes(nt, ct, itemsize, sub))

    # --- Case 1: a full (C, HW) slab per batch row fits -> grow Nt. ---------
    row = block_bytes(1, C, HW)
    if row <= budget_bytes:
        Nt = int(max(1, min(N, budget_bytes // row)))
        # On big tensors expose >= ~4 parallel grid blocks (both v7x
        # TensorCores + DMA/compute pipelining) as long as each block stays
        # >= ~512 KiB so the ~0.35 us/step grid overhead remains amortised.
        min_block = 512 * 1024
        if Nt == N and N * row >= 4 * min_block:
            if N >= 4:
                Nt = int(-(-N // 4))                       # ceil(N / 4)
            elif C > 256:
                ct = int(max(128, (-(-C // 4)) // 128 * 128))
                return Nt, ct, HW
        return Nt, C, HW

    # --- Case 2: full HW fits with a 128-multiple channel tile. -------------
    if C > 128 and block_bytes(1, 128, HW) <= budget_bytes:
        per_chan = (_round_up(HW, 128) + _round_up(2, sub)) * itemsize
        ct = (budget_bytes // per_chan) // 128 * 128
        ct = int(min(C, max(128, ct)))
        return 1, ct, HW

    # --- Case 3: HW itself is too large -> tile the reduction axis too. -----
    ct = C if C <= 128 else 128
    spare = max(0, budget_bytes - _padded_out_bytes(1, ct, itemsize, sub))
    thw = (spare // (_round_up(ct, sub) * itemsize)) // 128 * 128
    thw = int(max(128, thw))
    if thw >= HW:            # safety: a non-full HW block must be 128-aligned
        thw = HW
    return 1, int(ct), thw


def _make_kernel(hw_total, hw_tile):
    ragged_hw = (hw_total % hw_tile) != 0
    inv_hw = 1.0 / float(hw_total)                 # exact static constant

    def kernel(x_ref, out_ref, max_sc, sum_sc):
        # x_ref:   (Nt, Ct, THW) input block (THW == full HW unless HW-tiled).
        # out_ref: (Nt, 2, Ct)   row 0 = spatial max, row 1 = spatial mean.
        # max_sc / sum_sc: (Nt, Ct) f32 running accumulators (persist over hw).
        hw_id = pl.program_id(2)

        @pl.when(hw_id == 0)
        def _init():
            max_sc[...] = jnp.full(max_sc.shape, -jnp.inf, dtype=max_sc.dtype)
            sum_sc[...] = jnp.zeros(sum_sc.shape, dtype=sum_sc.dtype)

        x = x_ref[...].astype(jnp.float32)
        if ragged_hw:
            # Mask the lane padding of the last (ragged) HW block.  Keep the
            # iota 1-D along lanes so the temporary stays tiny.
            col = (jax.lax.broadcasted_iota(jnp.int32, (1, 1, hw_tile), 2)
                   + hw_id * hw_tile)
            valid = col < hw_total
            x_max = jnp.where(valid, x, -jnp.inf)
            x_sum = jnp.where(valid, x, 0.0)
        else:
            x_max = x
            x_sum = x

        max_sc[...] = jnp.maximum(max_sc[...], jnp.max(x_max, axis=-1))
        sum_sc[...] = sum_sc[...] + jnp.sum(x_sum, axis=-1)

        @pl.when(hw_id == pl.num_programs(2) - 1)
        def _finalize():
            out_ref[:, 0, :] = max_sc[...].astype(out_ref.dtype)
            out_ref[:, 1, :] = (sum_sc[...] * inv_hw).astype(out_ref.dtype)

    return kernel


def adaptive_concat_pool2d(x, *, block_budget_bytes=4 * 1024 * 1024):
    """x: (N, C, H, W) -> (N, 2*C, 1, 1), matching AdaptiveConcatPool2d(sz=None)."""
    N, C, H, W = x.shape
    HW = H * W
    x_flat = x.reshape(N, C, HW)                   # glue reshape in plain JAX
    itemsize = jnp.dtype(x.dtype).itemsize
    sub = _SUBLANES.get(itemsize, 8)

    Nt, Ct, THW = _choose_tiles(N, C, HW, itemsize, block_budget_bytes)
    grid = (pl.cdiv(N, Nt), pl.cdiv(C, Ct), pl.cdiv(HW, THW))

    # Explicit scoped-VMEM limit from the padded footprint: 2x double-buffered
    # input + output blocks, scratch accumulators, plus headroom for in-kernel
    # temporaries.  Clamped to [16 MiB, 32 MiB] -- safe on v5e/v6e/v7x.
    pad_in = _padded_in_bytes(Nt, Ct, THW, itemsize, sub)
    pad_out = _padded_out_bytes(Nt, Ct, itemsize, sub)
    scratch_bytes = 2 * _round_up(Nt, 8) * _round_up(Ct, 128) * 4
    vmem_limit = 2 * (pad_in + pad_out) + scratch_bytes + pad_in + (4 << 20)
    vmem_limit = int(min(max(vmem_limit, 16 << 20), 32 << 20))

    kernel = _make_kernel(HW, THW)

    out = pl.pallas_call(
        kernel,
        out_shape=jax.ShapeDtypeStruct((N, 2, C), x.dtype),
        grid_spec=pltpu.PrefetchScalarGridSpec(
            num_scalar_prefetch=0,
            grid=grid,
            in_specs=[
                pl.BlockSpec((Nt, Ct, THW), lambda n, c, h: (n, c, h)),
            ],
            out_specs=pl.BlockSpec((Nt, 2, Ct), lambda n, c, h: (n, 0, c)),
            scratch_shapes=[
                pltpu.VMEM((Nt, Ct), jnp.float32),   # running max
                pltpu.VMEM((Nt, Ct), jnp.float32),   # running sum (f32)
            ],
        ),
        compiler_params=pltpu.CompilerParams(
            dimension_semantics=("parallel", "parallel", "arbitrary"),
            vmem_limit_bytes=vmem_limit,
        ),
        cost_estimate=pl.CostEstimate(
            flops=2 * N * C * HW,                    # one compare + one add / element
            transcendentals=0,
            bytes_accessed=N * C * HW * itemsize + N * 2 * C * itemsize,
        ),
    )(x_flat)

    # (N, 2, C) flattens row-major to [max channels..., avg channels...] per n,
    # which is exactly torch.cat([mp(x), ap(x)], dim=1).
    return out.reshape(N, 2 * C, 1, 1)


def _reference(x):
    return jnp.concatenate(
        [
            jnp.max(x, axis=(2, 3), keepdims=True),
            jnp.mean(x, axis=(2, 3), keepdims=True),
        ],
        axis=1,
    )


if __name__ == "__main__":
    key = jax.random.PRNGKey(0)
    k1, k2 = jax.random.split(key)

    # Main check: the module's nominal small shape.
    N, C, H, W = 2, 4, 16, 16
    x = jax.random.normal(k1, (N, C, H, W), dtype=jnp.float32)
    out = jax.block_until_ready(adaptive_concat_pool2d(x))
    assert out.shape == (N, 2 * C, 1, 1), out.shape
    assert jnp.allclose(out, _reference(x), atol=1e-5, rtol=1e-5)

    # Second check: force the HW-tiled (ragged) reduction path with a tiny
    # block budget so the accumulator / mask logic is exercised too.
    x2 = jax.random.normal(k2, (2, 4, 48, 48), dtype=jnp.float32)
    out2 = jax.block_until_ready(
        adaptive_concat_pool2d(x2, block_budget_bytes=64 * 1024))
    assert out2.shape == (2, 8, 1, 1), out2.shape
    assert jnp.allclose(out2, _reference(x2), atol=1e-5, rtol=1e-5)

    print("KERNEL_OK")
</pallas_src>

<mosaic_0001>
module attributes {stable_mosaic.version = 11 : i64} {
  func.func @kernel(%arg0: i32, %arg1: i32, %arg2: i32, %arg3: memref<2x4x256xf32, #tpu.memory_space<vmem>>, %arg4: memref<2x2x4xf32, #tpu.memory_space<vmem>>, %arg5: memref<2x4xf32, #tpu.memory_space<vmem>>, %arg6: memref<2x4xf32, #tpu.memory_space<vmem>>) attributes {dimension_semantics = [#tpu.dimension_semantics<parallel>, #tpu.dimension_semantics<parallel>, #tpu.dimension_semantics<arbitrary>], iteration_bounds = array<i64: 1, 1, 1>, scalar_prefetch = 0 : i64, scratch_operands = 2 : i64, tpu.core_type = #tpu.core_type<tc>, window_params = [{transform_indices = @transform_0, window_bounds = array<i64: 2, 4, 256>}, {transform_indices = @transform_1, window_bounds = array<i64: 2, 2, 4>}]} {
    %c0_i32 = arith.constant 0 : i32
    %0 = arith.cmpi eq, %arg2, %c0_i32 : i32
    %1 = arith.extui %0 : i1 to i32
    %c0_i32_0 = arith.constant 0 : i32
    %2 = arith.cmpi ne, %1, %c0_i32_0 : i32
    scf.if %2 {
      %cst_14 = arith.constant 0xFF800000 : f32
      %15 = vector.broadcast %cst_14 : f32 to vector<2x4xf32>
      %c0_15 = arith.constant 0 : index
      %c0_16 = arith.constant 0 : index
      %16 = vector.load %arg5[%c0_15, %c0_16] : memref<2x4xf32, #tpu.memory_space<vmem>>, vector<2x4xf32>
      tpu.vector_store %arg5[%c0_15, %c0_16], %15 {strides = array<i32>} : memref<2x4xf32, #tpu.memory_space<vmem>>, vector<2x4xf32>,
      %cst_17 = arith.constant 0.000000e+00 : f32
      %17 = vector.broadcast %cst_17 : f32 to vector<2x4xf32>
      %c0_18 = arith.constant 0 : index
      %c0_19 = arith.constant 0 : index
      %18 = vector.load %arg6[%c0_18, %c0_19] : memref<2x4xf32, #tpu.memory_space<vmem>>, vector<2x4xf32>
      tpu.vector_store %arg6[%c0_18, %c0_19], %17 {strides = array<i32>} : memref<2x4xf32, #tpu.memory_space<vmem>>, vector<2x4xf32>,
    } else {
    }
    %c0 = arith.constant 0 : index
    %c0_1 = arith.constant 0 : index
    %c0_2 = arith.constant 0 : index
    %3 = vector.load %arg3[%c0, %c0_1, %c0_2] : memref<2x4x256xf32, #tpu.memory_space<vmem>>, vector<2x4x256xf32>
    %c0_3 = arith.constant 0 : index
    %c0_4 = arith.constant 0 : index
    %4 = vector.load %arg5[%c0_3, %c0_4] : memref<2x4xf32, #tpu.memory_space<vmem>>, vector<2x4xf32>
    %cst = arith.constant dense<0xFF800000> : vector<2x4xf32>
    %5 = vector.multi_reduction <maximumf>, %3, %cst [2] : vector<2x4x256xf32> to vector<2x4xf32>
    %6 = arith.maximumf %4, %5 : vector<2x4xf32>
    %c0_5 = arith.constant 0 : index
    %c0_6 = arith.constant 0 : index
    %7 = vector.load %arg5[%c0_5, %c0_6] : memref<2x4xf32, #tpu.memory_space<vmem>>, vector<2x4xf32>
    tpu.vector_store %arg5[%c0_5, %c0_6], %6 {strides = array<i32>} : memref<2x4xf32, #tpu.memory_space<vmem>>, vector<2x4xf32>,
    %c0_7 = arith.constant 0 : index
    %c0_8 = arith.constant 0 : index
    %8 = vector.load %arg6[%c0_7, %c0_8] : memref<2x4xf32, #tpu.memory_space<vmem>>, vector<2x4xf32>
    %cst_9 = arith.constant dense<0.000000e+00> : vector<2x4xf32>
    %9 = vector.multi_reduction <add>, %3, %cst_9 [2] : vector<2x4x256xf32> to vector<2x4xf32>
    %10 = arith.addf %8, %9 : vector<2x4xf32>
    %c0_10 = arith.constant 0 : index
    %c0_11 = arith.constant 0 : index
    %11 = vector.load %arg6[%c0_10, %c0_11] : memref<2x4xf32, #tpu.memory_space<vmem>>, vector<2x4xf32>
    tpu.vector_store %arg6[%c0_10, %c0_11], %10 {strides = array<i32>} : memref<2x4xf32, #tpu.memory_space<vmem>>, vector<2x4xf32>,
    %c0_i32_12 = arith.constant 0 : i32
    %12 = arith.cmpi eq, %arg2, %c0_i32_12 : i32
    %13 = arith.extui %12 : i1 to i32
    %c0_i32_13 = arith.constant 0 : i32
    %14 = arith.cmpi ne, %13, %c0_i32_13 : i32
    scf.if %14 {
      %c0_14 = arith.constant 0 : index
      %c0_15 = arith.constant 0 : index
      %15 = vector.load %arg5[%c0_14, %c0_15] : memref<2x4xf32, #tpu.memory_space<vmem>>, vector<2x4xf32>
      %c0_16 = arith.constant 0 : index
      %c0_17 = arith.constant 0 : index
      %c0_18 = arith.constant 0 : index
      %16 = vector.load %arg4[%c0_16, %c0_17, %c0_18] : memref<2x2x4xf32, #tpu.memory_space<vmem>>, vector<2x1x4xf32>
      %17 = vector.shape_cast %16 : vector<2x1x4xf32> to vector<2x4xf32>
      %18 = vector.shape_cast %15 : vector<2x4xf32> to vector<2x1x4xf32>
      tpu.vector_store %arg4[%c0_16, %c0_17, %c0_18], %18 {strides = array<i32>} : memref<2x2x4xf32, #tpu.memory_space<vmem>>, vector<2x1x4xf32>,
      %c0_19 = arith.constant 0 : index
      %c0_20 = arith.constant 0 : index
      %19 = vector.load %arg6[%c0_19, %c0_20] : memref<2x4xf32, #tpu.memory_space<vmem>>, vector<2x4xf32>
      %cst_21 = arith.constant 3.906250e-03 : f32
      %20 = vector.broadcast %cst_21 : f32 to vector<2x4xf32>
      %21 = arith.mulf %19, %20 : vector<2x4xf32>
      %c0_22 = arith.constant 0 : index
      %c1 = arith.constant 1 : index
      %c0_23 = arith.constant 0 : index
      %22 = vector.load %arg4[%c0_22, %c1, %c0_23] : memref<2x2x4xf32, #tpu.memory_space<vmem>>, vector<2x1x4xf32>
      %23 = vector.shape_cast %22 : vector<2x1x4xf32> to vector<2x4xf32>
      %24 = vector.shape_cast %21 : vector<2x4xf32> to vector<2x1x4xf32>
      tpu.vector_store %arg4[%c0_22, %c1, %c0_23], %24 {strides = array<i32>} : memref<2x2x4xf32, #tpu.memory_space<vmem>>, vector<2x1x4xf32>,
    } else {
    }
    return
  }
  func.func @transform_0(%arg0: i32, %arg1: i32, %arg2: i32) -> (i32, i32, i32) {
    %c0_i32 = arith.constant 0 : i32
    return %arg0, %arg1, %arg2 : i32, i32, i32
  }
  func.func @transform_1(%arg0: i32, %arg1: i32, %arg2: i32) -> (i32, i32, i32) {
    %c0_i32 = arith.constant 0 : i32
    %c0_i32_0 = arith.constant 0 : i32
    return %arg0, %c0_i32, %arg1 : i32, i32, i32
  }
}

</mosaic_0001>

<llo_original>
// kernel: tpu_custom_call.1
$region0: #{tpu_custom_call.1}
  #allocation0 [shape = 'u32[]', space=smem, size = 0x4, offset = 0x4, fixed_abs, tag = 'smem constant byte address 0x4 - core index']
  #allocation1 [shape = 'u32[144,128]{1,0:T(1,128)}', space=vmem, size = 0x12000, scoped, tag = 'internal scratch']
  #allocation2 [shape = 'f32[2,4]{1,0:T(2,128)}', space=vmem, size = 0x400, scoped, tag = 'scratch operand']
  #allocation3 [shape = 'f32[2,4]{1,0:T(2,128)}', space=vmem, size = 0x400, scoped, tag = 'scratch operand']
  %s0 = inlined_call_operand.hbm [shape: f32[2,4,256], index: 0, kind: input, shape index: {}]
  %s1 = inlined_call_operand.hbm [shape: f32[2,2,4], index: 1, kind: output, shape index: {}]
  %s2 = sld [smem:[#allocation0]]
  $region26: #{tpu_custom_call.1} parent=0
    _
  %s4 = ssub.s32 1, %s2
  %s5 = scalar_select 0, %s4, %s2
  $region1: #{tpu_custom_call.1} parent=0
    #allocation4 [shape = 'u8[8192]{0}', space=vmem, size = 0x2000, scoped, tag = 'input window, operand 0, single buffered']
    #allocation5 [shape = 's32[1]{0}', space=sflag, size = 0x4, scoped, tag = 'scoped memory for tpu_custom_call.1']
    #allocation6 [shape = 's32[1]{0}', space=sflag, size = 0x4, scoped, tag = 'scoped memory for tpu_custom_call.1']
    #allocation7 [shape = 'u8[2048]{0}', space=vmem, size = 0x800, scoped, tag = 'output window, operand 0, single buffered']
    %6 = vsyncpa [#allocation5], 0
    %7 = vsyncpa [#allocation6], 0
    // Predicated region
    $region2: #{tpu_custom_call.1} parent=1 // pred_check
      _
    $region3: #{tpu_custom_call.1} parent=1 // pred_check_branch
      %9 = sbr.rel (0) target = $region5
    $region4: #{tpu_custom_call.1} parent=1 // pred_region
      %s11 = ssub.s32 256, 256
      %12 = vsyncadd [#allocation5], %s11
      %s13 = sshll.u32 [#allocation4], 4
      %s14 = int_to_ptr.vmem [resolvable:$true] %s13
      %19 = dma.hbm_to_vmem [thread:$0]  %s0, 256, %s14, [#allocation5], 128, 128, 8
    $region5: #{tpu_custom_call.1} parent=1 // pred_fallthru
      _
    // Predicated region
    $region6: #{tpu_custom_call.1} parent=1 // pred_check
      _
    $region7: #{tpu_custom_call.1} parent=1 // pred_check_branch
      %21 = sbr.rel (0) target = $region9
    $region8: #{tpu_custom_call.1} parent=1 // pred_region
      %22 = dma.done [#allocation5], 256
    $region9: #{tpu_custom_call.1} parent=1 // pred_fallthru
      _
    %p23 = scmp.eq.s32.totalorder 0, 0
    // Predicated region
    $region10: #{tpu_custom_call.1} parent=1 // pred_check
      %p24 = pneg %p23
    $region11: #{tpu_custom_call.1} parent=1 // pred_check_branch
      %26 = sbr.rel (%p24) target = $region13
    $region12: #{tpu_custom_call.1} parent=1 // pred_region
      %vm27 = vcmask 25600
      %28 = vst.msk [vmem:[#allocation2] sm:$0x3] %vm27, -inf
      %29 = vst.msk [vmem:[#allocation3] sm:$0x3] %vm27, 0.0
    $region13: #{tpu_custom_call.1} parent=1 // pred_fallthru
      _
    %v30 = vld [vmem:[#allocation4] sm:$0xff]
    %v31 = vld [vmem:[#allocation4 + $0x8] sm:$0xff]
    %v32 = vld [vmem:[#allocation2] sm:$0x3]
    %v35 = vcombine.high %v30, %v30
    %v36 = vcombine.high %v31, %v31
    %vm39 = vcmask 1043456
    %v40 = vsel %vm39, %v30, -inf
    %v41 = vsel %vm39, %v35, -inf
    %v42 = vmax.f32 %v40, %v41
    %43 = vmax.xlane.f32.xlu0 %v42
    %v44 = vpop.xlane.xlu0 %43
    %v45 = vsel %vm39, %v31, -inf
    %v46 = vsel %vm39, %v36, -inf
    %v47 = vmax.f32 %v45, %v46
    %48 = vmax.xlane.f32.xlu0 %v47
    %v49 = vpop.xlane.xlu0 %48
    %v52 = vlaneseq
    %v53 = vand.u32 %v52, 127
    %v54 = vlaneseq
    %v55 = vshrl.u32 %v54, 7
    %v56 = vsub.s32 %v53, %v55
    %v57 = vrot.slane %v44, %v56
    %v58 = vlaneseq
    %v59 = vshrl.u32 %v58, 7
    %v60 = vsub.s32 %v53, %v59
    %v61 = vrot.slane %v49, %v60
    %vm62 = vcmask 1041409
    %v63 = vsel %vm62, %v61, %v57
    %v65 = vmax.f32 %v32, %v63
    %vm66 = vcmask 25600
    %67 = vst.msk [vmem:[#allocation2] sm:$0x3] %vm66, %v65
    %v68 = vld [vmem:[#allocation3] sm:$0x3]
    %v69 = vsel %vm39, %v30, 0.0
    %v70 = vsel %vm39, %v35, 0.0
    %v71 = vadd.f32 %v69, %v70
    %72 = vadd.xlane.f32.xlu0 %v71
    %v73 = vpop.xlane.xlu0 %72
    %v74 = vsel %vm39, %v31, 0.0
    %v75 = vsel %vm39, %v36, 0.0
    %v76 = vadd.f32 %v74, %v75
    %77 = vadd.xlane.f32.xlu0 %v76
    %v78 = vpop.xlane.xlu0 %77
    %v81 = vlaneseq
    %v82 = vshrl.u32 %v81, 7
    %v83 = vsub.s32 %v53, %v82
    %v84 = vrot.slane %v73, %v83
    %v85 = vlaneseq
    %v86 = vshrl.u32 %v85, 7
    %v87 = vsub.s32 %v53, %v86
    %v88 = vrot.slane %v78, %v87
    %v89 = vsel %vm62, %v88, %v84
    %v91 = vadd.f32 %v68, %v89
    %92 = vst.msk [vmem:[#allocation3] sm:$0x3] %vm66, %v91
    // Predicated region
    $region14: #{tpu_custom_call.1} parent=1 // pred_check
      %p93 = pneg %p23
    $region15: #{tpu_custom_call.1} parent=1 // pred_check_branch
      %95 = sbr.rel (%p93) target = $region17
    $region16: #{tpu_custom_call.1} parent=1 // pred_region
      %v96 = vld [vmem:[#allocation2] sm:$0x3]
      %v99 = vunpack.c.l.s4 1966171168
      %v100 = vunpack.c.0.s8 %v99
      %v101 = vlaneseq
      %v102 = vshrl.u32 %v101, 7
      %v103 = vsub.s32 %v100, %v102
      %v104 = vrot.slane %v96, %v103
      %v105 = vcombine.high %v104, %v104
      %v107 = vunpack.c.l.s4 1966171168
      %v108 = vunpack.c.0.s8 %v107
      %v109 = vlaneseq
      %v110 = vshrl.u32 %v109, 7
      %v111 = vsub.s32 %v108, %v110
      %v112 = vrot.slane %v104, %v111
      %v114 = vunpack.c.l.s4 1966171168
      %v115 = vunpack.c.0.s8 %v114
      %v116 = vlaneseq
      %v117 = vshrl.u32 %v116, 7
      %v118 = vsub.s32 %v115, %v117
      %v119 = vrot.slane %v105, %v118
      %vm122 = vcmask 24576
      %123 = vst.msk [vmem:[#allocation7] sm:$0x1] %vm122, %v112
      %124 = vst.msk [vmem:[#allocation7 + $0x2] sm:$0x1] %vm122, %v119
      %v125 = vld [vmem:[#allocation3] sm:$0x3]
      %v126 = vmul.f32 %v125, 0.00390625
      %v129 = vunpack.c.l.s4 1966171168
      %v130 = vunpack.c.0.s8 %v129
      %v131 = vlaneseq
      %v132 = vshrl.u32 %v131, 7
      %v133 = vsub.s32 %v130, %v132
      %v134 = vrot.slane %v126, %v133
      %v135 = vcombine.high %v134, %v134
      %v137 = vunpack.c.l.s4 1966171168
      %v138 = vunpack.c.0.s8 %v137
      %v139 = vlaneseq
      %v140 = vshrl.u32 %v139, 7
      %v141 = vsub.s32 %v138, %v140
      %v142 = vrot.slane %v134, %v141
      %v144 = vunpack.c.l.s4 1966171168
      %v145 = vunpack.c.0.s8 %v144
      %v146 = vlaneseq
      %v147 = vshrl.u32 %v146, 7
      %v148 = vsub.s32 %v145, %v147
      %v149 = vrot.slane %v135, %v148
      %152 = vst.msk [vmem:[#allocation7 + $0x1] sm:$0x1] %vm122, %v142
      %153 = vst.msk [vmem:[#allocation7 + $0x3] sm:$0x1] %vm122, %v149
    $region17: #{tpu_custom_call.1} parent=1 // pred_fallthru
      _
    // Predicated region
    $region18: #{tpu_custom_call.1} parent=1 // pred_check
      _
    $region19: #{tpu_custom_call.1} parent=1 // pred_check_branch
      %155 = sbr.rel (0) target = $region21
    $region20: #{tpu_custom_call.1} parent=1 // pred_region
      %s157 = ssub.s32 64, 64
      %158 = vsyncadd [#allocation6], %s157
      %s159 = sshll.u32 [#allocation7], 4
      %s160 = int_to_ptr.vmem [resolvable:$true] %s159
      %165 = dma.vmem_to_hbm [thread:$0]  %s160, 64, %s1, [#allocation6], 32, 32, 2
    $region21: #{tpu_custom_call.1} parent=1 // pred_fallthru
      _
    // Predicated region
    $region22: #{tpu_custom_call.1} parent=1 // pred_check
      _
    $region23: #{tpu_custom_call.1} parent=1 // pred_check_branch
      %167 = sbr.rel (0) target = $region25
    $region24: #{tpu_custom_call.1} parent=1 // pred_region
      %168 = dma.done [#allocation6], 64
    $region25: #{tpu_custom_call.1} parent=1 // pred_fallthru
      _
    %169 = vsyncpa [#allocation5], 1
    %170 = vsyncpa [#allocation6], 1

</llo_original>
